<compile_context>
chip_gen: v7x
topology: tpu7x:2x2x1
jax: 0.10.0
libtpu: 0.0.40
codegen_flags: <defaults>
</compile_context>

<pallas_src>
import functools

import numpy as np

import jax
import jax.numpy as jnp
from jax import lax
from jax.experimental import pallas as pl
from jax.experimental.pallas import tpu as pltpu

# ---- scaled-down shapes (deepseek-coder uses 4096 / 2048; synthetic here) ----
B = 16           # batch (demo)
TB = 8           # batch tile per grid step (>=256 recommended in production)
L_EMB = 256      # "large model" embedding size
S_EMB = 128      # "small model" embedding size
EMB_TOT = L_EMB + S_EMB             # 384 = 3 * 128, lane-tile aligned
SCALE = 32       # scale_size
N_SCALAR = 25    # scalar features concatenated after the two projections
INPUT_SIZE = 2 * SCALE + N_SCALAR   # 89 (fc1 fan-in before folding)
H1, H2 = 20, 16
BN_EPS = 1e-5

# Raw feature columns (order of the [B, NF] feature matrix).
_FEATURE_KEYS = [
    "len_generate_token_ids", "len_generate_words", "len_input_ids",
    "len_input_words", "len_statements", "len_lastline",
    "l_token_prob", "s_token_prob", "l_prob_of_s_token", "s_prob_of_l_token",
    "l_word_type", "s_word_type",
    "l_token_id_cnt", "s_token_id_cnt", "l_word_cnt", "s_word_cnt",
    "l_subword_cnt", "s_subword_cnt",
    "l_word_gauss_cnt", "s_word_gauss_cnt",
    "l_subword_gauss_cnt", "s_subword_gauss_cnt",
    "l_statement_ids_cnt", "s_statement_ids_cnt",
    "l_statement_cnt", "s_statement_cnt",
    "l_multiline_cnt", "s_multiline_cnt",
    "l_bm25_of_context", "s_bm25_of_context",
    "l_bm25_of_lastline", "s_bm25_of_lastline",
    "l_bm25_of_context_with_lastline", "s_bm25_of_context_with_lastline",
    "l_statement_cnt_in_corpus", "s_statement_cnt_in_corpus",
    "l_statement_cnt_in_corpus_with_lastline",
    "s_statement_cnt_in_corpus_with_lastline",
    "l_avg_top_k_jaccard_with_lastline_in_corpus",
    "s_avg_top_k_jaccard_with_lastline_in_corpus",
    "l_top_k_jaccard_in_corpus", "s_top_k_jaccard_in_corpus",
]
NF = len(_FEATURE_KEYS)                      # 42
_KEY_IDX = {k: i for i, k in enumerate(_FEATURE_KEYS)}

_I_LTP = _KEY_IDX["l_token_prob"]
_I_STP = _KEY_IDX["s_token_prob"]
_I_LPS = _KEY_IDX["l_prob_of_s_token"]
_I_SPL = _KEY_IDX["s_prob_of_l_token"]
# The four gate log-probs must be contiguous so one slice + one exp covers them.
assert (_I_STP, _I_LPS, _I_SPL) == (_I_LTP + 1, _I_LTP + 2, _I_LTP + 3)

# The 25 derived scalar columns of the fused feature vector, in torch.cat order:
# (positive_key, negative_key_or_None, denominator_key_or_None, apply_sign)
_SCALAR_SPEC = [
    ("l_token_prob", None, None, False),
    ("s_token_prob", None, None, False),
    ("l_prob_of_s_token", None, None, False),
    ("s_prob_of_l_token", None, None, False),
    ("l_word_type", None, None, False),
    ("s_word_type", None, None, False),
    ("len_generate_token_ids", None, None, False),
    ("len_generate_words", None, None, False),
    ("len_lastline", None, None, False),
    ("l_token_id_cnt", "s_token_id_cnt", "len_input_ids", False),
    ("l_word_cnt", "s_word_cnt", "len_input_words", False),
    ("l_subword_cnt", "s_subword_cnt", "len_input_words", False),
    ("l_word_gauss_cnt", "s_word_gauss_cnt", None, False),
    ("l_subword_gauss_cnt", "s_subword_gauss_cnt", None, False),
    ("l_statement_ids_cnt", None, None, False),
    ("s_statement_ids_cnt", None, None, False),
    ("l_statement_cnt", "s_statement_cnt", "len_statements", False),
    ("l_multiline_cnt", "s_multiline_cnt", None, False),
    ("l_bm25_of_context", "s_bm25_of_context", None, False),
    ("l_bm25_of_lastline", "s_bm25_of_lastline", None, False),
    ("l_bm25_of_context_with_lastline", "s_bm25_of_context_with_lastline",
     None, False),
    ("l_statement_cnt_in_corpus", "s_statement_cnt_in_corpus", None, True),
    ("l_statement_cnt_in_corpus_with_lastline",
     "s_statement_cnt_in_corpus_with_lastline", None, True),
    ("l_avg_top_k_jaccard_with_lastline_in_corpus",
     "s_avg_top_k_jaccard_with_lastline_in_corpus", None, True),
    ("l_top_k_jaccard_in_corpus", "s_top_k_jaccard_in_corpus", None, True),
]
assert len(_SCALAR_SPEC) == N_SCALAR

# Static column sets used to rebuild the denominator / sign masks in-kernel.
_DEN_COLS = tuple(j for j, (_, _, den, _) in enumerate(_SCALAR_SPEC)
                  if den is not None)
_SIGN_COLS = tuple(j for j, (_, _, _, sgn) in enumerate(_SCALAR_SPEC) if sgn)


def build_sel_all():
    """One [NF, 2*N_SCALAR] selection matrix: lanes 0..24 = (pos - neg),
    lanes 25..49 = denominator (0 row -> denominator of 0, masked to 1 in-kernel)."""
    sel = np.zeros((NF, 2 * N_SCALAR), np.float32)
    for j, (pos, neg, den, _) in enumerate(_SCALAR_SPEC):
        sel[_KEY_IDX[pos], j] = 1.0
        if neg is not None:
            sel[_KEY_IDX[neg], j] = -1.0
        if den is not None:
            sel[_KEY_IDX[den], N_SCALAR + j] = 1.0
    return jnp.asarray(sel)


# ------------------------------- Pallas kernel --------------------------------
def _fused_kernel(emb_ref, feat_ref, sel_ref, wemb_ref, w1s_ref, b1_ref,
                  w2_ref, b2_ref, w3_ref, b3_ref, out_ref):
    """FeatureFusion + fc1(+BN1)+ReLU + fc2(+BN2)+ReLU + fc3 + sigmoid."""
    feat = feat_ref[...]                                   # [TB, NF] f32

    # ---- prob gates: contiguous [TB, 4] slice, one exp, exact normalization ----
    probs = feat[:, _I_LTP:_I_SPL + 1]                     # [TB, 4]
    m = jnp.max(probs, axis=-1, keepdims=True)             # overflow safety
    e = jnp.exp(probs - m)
    l_num = e[:, 0:1] + e[:, 3:4]                          # exp(ltp)+exp(spl)
    s_num = e[:, 1:2] + e[:, 2:3]                          # exp(stp)+exp(lps)
    tot = l_num + s_num
    l_w = l_num / tot                                      # [TB, 1]
    s_w = s_num / tot                                      # [TB, 1]

    # ---- 25 derived scalar feature columns: one selection matmul ----
    y = jnp.dot(feat, sel_ref[...], preferred_element_type=jnp.float32)
    diff = y[:, :N_SCALAR]                                 # [TB, 25]
    den_raw = y[:, N_SCALAR:]                              # [TB, 25]
    cols = lax.broadcasted_iota(jnp.int32, (1, N_SCALAR), 1)
    has_den = functools.reduce(jnp.logical_or,
                               [cols == c for c in _DEN_COLS])
    is_sign = functools.reduce(jnp.logical_or,
                               [cols == c for c in _SIGN_COLS])
    ratio = diff / jnp.where(has_den, den_raw, 1.0)
    # sign() with torch semantics (NaN propagates, 0 -> 0).
    sgn = jnp.where(ratio > 0.0, 1.0, jnp.where(ratio < 0.0, -1.0, ratio))
    scal = jnp.where(is_sign, sgn, ratio)                  # [TB, 25] f32

    # ---- fc1 with fc_l / fc_s and BN1 folded: one bf16 matmul + f32 scal dot --
    emb = emb_ref[...]                                     # [TB, 384] bf16
    x_l = emb[:, :L_EMB] * l_w.astype(emb.dtype)
    x_s = emb[:, L_EMB:] * s_w.astype(emb.dtype)
    x = jnp.concatenate([x_l, x_s], axis=-1)               # [TB, 384] bf16
    h = (jnp.dot(x, wemb_ref[...], preferred_element_type=jnp.float32)
         + jnp.dot(scal, w1s_ref[...], preferred_element_type=jnp.float32)
         + b1_ref[...])
    h = jnp.maximum(h, 0.0)                                # ReLU (dropout = id)

    # ---- fc2 (BN2 folded) + ReLU ----
    h2 = jnp.dot(h.astype(jnp.bfloat16), w2_ref[...],
                 preferred_element_type=jnp.float32) + b2_ref[...]
    h2 = jnp.maximum(h2, 0.0)                              # [TB, H2]

    # ---- fc3 as a lane reduce (avoids a width-1 MXU push) + exact sigmoid ----
    z = jnp.sum(h2 * w3_ref[...], axis=-1, keepdims=True) + b3_ref[...]
    out_ref[...] = 1.0 / (1.0 + jnp.exp(-z))


def _fused_call(emb, feat, sel_all, kp, tb):
    b_pad = emb.shape[0]
    grid = (b_pad // tb,)
    return pl.pallas_call(
        _fused_kernel,
        out_shape=jax.ShapeDtypeStruct((b_pad, 1), jnp.float32),
        grid=grid,
        in_specs=[
            pl.BlockSpec((tb, EMB_TOT), lambda i: (i, 0)),          # emb
            pl.BlockSpec((tb, NF), lambda i: (i, 0)),               # feat
            pl.BlockSpec((NF, 2 * N_SCALAR), lambda i: (0, 0)),     # sel_all
            pl.BlockSpec((EMB_TOT, H1), lambda i: (0, 0)),          # wemb
            pl.BlockSpec((N_SCALAR, H1), lambda i: (0, 0)),         # w1s
            pl.BlockSpec((1, H1), lambda i: (0, 0)),                # b1
            pl.BlockSpec((H1, H2), lambda i: (0, 0)),               # w2
            pl.BlockSpec((1, H2), lambda i: (0, 0)),                # b2
            pl.BlockSpec((1, H2), lambda i: (0, 0)),                # w3 (row)
            pl.BlockSpec((1, 1), lambda i: (0, 0)),                 # b3
        ],
        out_specs=pl.BlockSpec((tb, 1), lambda i: (i, 0)),
        compiler_params=pltpu.CompilerParams(
            dimension_semantics=("parallel",)),                     # v7x: 2 TCs
    )(emb, feat, sel_all, kp["wemb"], kp["w1s"], kp["b1"],
      kp["w2"], kp["b2"], kp["w3"], kp["b3"])


# ------------------------------ parameter init --------------------------------
def _kaiming_uniform(key, fan_in, fan_out):
    bound = float(np.sqrt(6.0 / fan_in))
    return jax.random.uniform(key, (fan_in, fan_out), jnp.float32, -bound, bound)


def _xavier_normal(key, fan_in, fan_out):
    std = float(np.sqrt(2.0 / (fan_in + fan_out)))
    return std * jax.random.normal(key, (fan_in, fan_out), jnp.float32)


def _linear_bias(key, fan_in, fan_out):
    bound = 1.0 / float(np.sqrt(fan_in))
    return jax.random.uniform(key, (1, fan_out), jnp.float32, -bound, bound)


def init_raw_params(key):
    """Torch-like init; weights stored as [in, out], biases as [1, out]."""
    ks = jax.random.split(key, 10)
    p = {}
    p["wl"] = _kaiming_uniform(ks[0], L_EMB, SCALE)
    p["bl"] = _linear_bias(ks[1], L_EMB, SCALE)
    p["ws"] = _kaiming_uniform(ks[2], S_EMB, SCALE)
    p["bs"] = _linear_bias(ks[3], S_EMB, SCALE)
    p["w1"] = _kaiming_uniform(ks[4], INPUT_SIZE, H1)
    p["b1"] = _linear_bias(ks[5], INPUT_SIZE, H1)
    p["w2"] = _kaiming_uniform(ks[6], H1, H2)
    p["b2"] = _linear_bias(ks[7], H1, H2)
    p["w3"] = _xavier_normal(ks[8], H2, 1)
    p["b3"] = _linear_bias(ks[9], H2, 1)
    # BatchNorm1d defaults (eval mode): gamma=1, beta=0, mean=0, var=1.
    for name, dim in (("1", H1), ("2", H2)):
        p["gamma" + name] = jnp.ones((1, dim), jnp.float32)
        p["beta" + name] = jnp.zeros((1, dim), jnp.float32)
        p["mean" + name] = jnp.zeros((1, dim), jnp.float32)
        p["var" + name] = jnp.ones((1, dim), jnp.float32)
    return p


def fold_params(p):
    """Fold BN(eval) into fc1/fc2 and the fc_l/fc_s projections into fc1.

    Exact algebra: BN-eval is a per-channel affine, and the per-row gates
    l_w/s_w commute with the matmuls:
        ((emb_l*l_w) @ wl) @ W1_l == (emb_l*l_w) @ (wl @ W1_l).
    fc_l/fc_s folded weights are stacked into one [EMB_TOT, H1] matrix so fc1's
    embedding part is a single MXU op.  Largest weights stored in bf16.
    """
    s1 = p["gamma1"] / jnp.sqrt(p["var1"] + BN_EPS)
    t1 = p["beta1"] - p["mean1"] * s1
    s2 = p["gamma2"] / jnp.sqrt(p["var2"] + BN_EPS)
    t2 = p["beta2"] - p["mean2"] * s2

    w1_bn = p["w1"] * s1                 # [INPUT_SIZE, H1]
    b1_bn = p["b1"] * s1 + t1            # [1, H1]
    w1_l = w1_bn[:SCALE]                 # rows for the fc_l projection
    w1_s = w1_bn[SCALE:2 * SCALE]        # rows for the fc_s projection
    w1_scal = w1_bn[2 * SCALE:]          # rows for the 25 scalar columns

    wemb = jnp.concatenate([p["wl"] @ w1_l, p["ws"] @ w1_s], axis=0)  # [384,H1]
    b1 = p["bl"] @ w1_l + p["bs"] @ w1_s + b1_bn                      # [1, H1]

    return {
        "wemb": wemb.astype(jnp.bfloat16),
        "w1s": w1_scal.astype(jnp.float32),          # scalar path stays f32
        "b1": b1.astype(jnp.float32),
        "w2": (p["w2"] * s2).astype(jnp.bfloat16),
        "b2": (p["b2"] * s2 + t2).astype(jnp.float32),
        "w3": jnp.transpose(p["w3"]).astype(jnp.float32),             # [1, H2]
        "b3": p["b3"].astype(jnp.float32),
    }


# ----------------------------- feature synthesis -------------------------------
def make_feature_matrix(key, batch):
    """One vectorized [batch, NF] draw with per-column ranges (no per-key glue)."""
    lo = np.zeros((NF,), np.float32)
    hi = np.full((NF,), 5.0, np.float32)
    for i, name in enumerate(_FEATURE_KEYS):
        if name.startswith("len_"):
            lo[i], hi[i] = 1.0, 10.0      # keep denominators away from zero
        elif "prob" in name:
            lo[i], hi[i] = -5.0, 0.0      # log-prob-like
    u = jax.random.uniform(key, (batch, NF), jnp.float32)
    return u * jnp.asarray(hi - lo) + jnp.asarray(lo)


# ---------------------------------- forward ------------------------------------
@functools.partial(jax.jit, static_argnames=("tb",))
def classifier_mlp_forward(kparams, sel_all, embedding, feat, *, tb=TB):
    b = embedding.shape[0]
    n_tiles = pl.cdiv(b, tb)
    b_pad = n_tiles * tb
    if b_pad != b:
        embedding = jnp.pad(embedding, ((0, b_pad - b), (0, 0)))
        feat = jnp.pad(feat, ((0, b_pad - b), (0, 0)), constant_values=1.0)
    emb_bf16 = embedding.astype(jnp.bfloat16)
    out = _fused_call(emb_bf16, feat, sel_all, kparams, tb)
    return out[:b]


if __name__ == "__main__":
    root = jax.random.PRNGKey(0)
    k_param, k_emb, k_feat = jax.random.split(root, 3)

    raw_params = init_raw_params(k_param)
    kparams = fold_params(raw_params)          # done once, outside the hot path
    sel_all = build_sel_all()                  # constant selection matrix

    embedding = jax.random.normal(k_emb, (B, EMB_TOT), jnp.float32)
    feat = make_feature_matrix(k_feat, B)

    out = classifier_mlp_forward(kparams, sel_all, embedding, feat)
    out = jax.block_until_ready(out)

    assert out.shape == (B, 1)
    assert bool(jnp.all(jnp.isfinite(out)))
    assert bool(jnp.all((out >= 0.0) & (out <= 1.0)))
    print("KERNEL_OK")
</pallas_src>

<mosaic_0001>
module attributes {stable_mosaic.version = 11 : i64} {
  func.func @_fused_kernel(%arg0: i32, %arg1: memref<8x384xbf16, #tpu.memory_space<vmem>>, %arg2: memref<8x42xf32, #tpu.memory_space<vmem>>, %arg3: memref<42x50xf32, #tpu.memory_space<vmem>>, %arg4: memref<384x20xbf16, #tpu.memory_space<vmem>>, %arg5: memref<25x20xf32, #tpu.memory_space<vmem>>, %arg6: memref<1x20xf32, #tpu.memory_space<vmem>>, %arg7: memref<20x16xbf16, #tpu.memory_space<vmem>>, %arg8: memref<1x16xf32, #tpu.memory_space<vmem>>, %arg9: memref<1x16xf32, #tpu.memory_space<vmem>>, %arg10: memref<1x1xf32, #tpu.memory_space<vmem>>, %arg11: memref<8x1xf32, #tpu.memory_space<vmem>>) attributes {dimension_semantics = [#tpu.dimension_semantics<parallel>], iteration_bounds = array<i64: 2>, scalar_prefetch = 0 : i64, scratch_operands = 0 : i64, tpu.core_type = #tpu.core_type<tc>, window_params = [{transform_indices = @transform_0, window_bounds = array<i64: 8, 384>}, {transform_indices = @transform_1, window_bounds = array<i64: 8, 42>}, {pipeline_mode = #tpu.pipeline_mode<synchronous>, transform_indices = @transform_2, window_bounds = array<i64: 42, 50>}, {pipeline_mode = #tpu.pipeline_mode<synchronous>, transform_indices = @transform_3, window_bounds = array<i64: 384, 20>}, {pipeline_mode = #tpu.pipeline_mode<synchronous>, transform_indices = @transform_4, window_bounds = array<i64: 25, 20>}, {pipeline_mode = #tpu.pipeline_mode<synchronous>, transform_indices = @transform_5, window_bounds = array<i64: 1, 20>}, {pipeline_mode = #tpu.pipeline_mode<synchronous>, transform_indices = @transform_6, window_bounds = array<i64: 20, 16>}, {pipeline_mode = #tpu.pipeline_mode<synchronous>, transform_indices = @transform_7, window_bounds = array<i64: 1, 16>}, {pipeline_mode = #tpu.pipeline_mode<synchronous>, transform_indices = @transform_8, window_bounds = array<i64: 1, 16>}, {pipeline_mode = #tpu.pipeline_mode<synchronous>, transform_indices = @transform_9, window_bounds = array<i64: 1, 1>}, {transform_indices = @transform_10, window_bounds = array<i64: 8, 1>}]} {
    %c0 = arith.constant 0 : index
    %c0_0 = arith.constant 0 : index
    %0 = vector.load %arg2[%c0, %c0_0] : memref<8x42xf32, #tpu.memory_space<vmem>>, vector<8x42xf32>
    %1 = vector.extract_strided_slice %0 {offsets = [0, 6], sizes = [8, 4], strides = [1, 1]} : vector<8x42xf32> to vector<8x4xf32>
    %cst = arith.constant dense<0xFF800000> : vector<8xf32>
    %2 = vector.multi_reduction <maximumf>, %1, %cst [1] : vector<8x4xf32> to vector<8xf32>
    %3 = vector.shape_cast %2 : vector<8xf32> to vector<8x1xf32>
    %4 = vector.broadcast %3 : vector<8x1xf32> to vector<8x4xf32>
    %5 = arith.subf %1, %4 : vector<8x4xf32>
    %6 = math.exp %5 : vector<8x4xf32>
    %7 = vector.extract_strided_slice %6 {offsets = [0, 0], sizes = [8, 1], strides = [1, 1]} : vector<8x4xf32> to vector<8x1xf32>
    %8 = vector.extract_strided_slice %6 {offsets = [0, 3], sizes = [8, 1], strides = [1, 1]} : vector<8x4xf32> to vector<8x1xf32>
    %9 = arith.addf %7, %8 : vector<8x1xf32>
    %10 = vector.extract_strided_slice %6 {offsets = [0, 1], sizes = [8, 1], strides = [1, 1]} : vector<8x4xf32> to vector<8x1xf32>
    %11 = vector.extract_strided_slice %6 {offsets = [0, 2], sizes = [8, 1], strides = [1, 1]} : vector<8x4xf32> to vector<8x1xf32>
    %12 = arith.addf %10, %11 : vector<8x1xf32>
    %13 = arith.addf %9, %12 : vector<8x1xf32>
    %14 = arith.divf %9, %13 : vector<8x1xf32>
    %15 = arith.divf %12, %13 : vector<8x1xf32>
    %c0_1 = arith.constant 0 : index
    %c0_2 = arith.constant 0 : index
    %16 = vector.load %arg3[%c0_1, %c0_2] : memref<42x50xf32, #tpu.memory_space<vmem>>, vector<42x50xf32>
    %cst_3 = arith.constant dense<0.000000e+00> : vector<8x50xf32>
    %17 = tpu.matmul %0, %16, %cst_3 {dimension_numbers = #tpu.dot_dimension_numbers<[1], [0], [0], [1], [0, 0, 1, 1], [], []>} : vector<8x42xf32>, vector<42x50xf32>, vector<8x50xf32> -> vector<8x50xf32>
    %18 = vector.extract_strided_slice %17 {offsets = [0, 0], sizes = [8, 25], strides = [1, 1]} : vector<8x50xf32> to vector<8x25xf32>
    %19 = vector.extract_strided_slice %17 {offsets = [0, 25], sizes = [8, 25], strides = [1, 1]} : vector<8x50xf32> to vector<8x25xf32>
    %20 = tpu.iota {dimensions = array<i32: 1>} : vector<1x25xi32>
    %c9_i32 = arith.constant 9 : i32
    %21 = vector.broadcast %c9_i32 : i32 to vector<1x25xi32>
    %22 = arith.cmpi eq, %20, %21 : vector<1x25xi32>
    %c10_i32 = arith.constant 10 : i32
    %23 = vector.broadcast %c10_i32 : i32 to vector<1x25xi32>
    %24 = arith.cmpi eq, %20, %23 : vector<1x25xi32>
    %c11_i32 = arith.constant 11 : i32
    %25 = vector.broadcast %c11_i32 : i32 to vector<1x25xi32>
    %26 = arith.cmpi eq, %20, %25 : vector<1x25xi32>
    %c16_i32 = arith.constant 16 : i32
    %27 = vector.broadcast %c16_i32 : i32 to vector<1x25xi32>
    %28 = arith.cmpi eq, %20, %27 : vector<1x25xi32>
    %29 = arith.ori %22, %24 : vector<1x25xi1>
    %30 = arith.ori %29, %26 : vector<1x25xi1>
    %31 = arith.ori %30, %28 : vector<1x25xi1>
    %c21_i32 = arith.constant 21 : i32
    %32 = vector.broadcast %c21_i32 : i32 to vector<1x25xi32>
    %33 = arith.cmpi eq, %20, %32 : vector<1x25xi32>
    %c22_i32 = arith.constant 22 : i32
    %34 = vector.broadcast %c22_i32 : i32 to vector<1x25xi32>
    %35 = arith.cmpi eq, %20, %34 : vector<1x25xi32>
    %c23_i32 = arith.constant 23 : i32
    %36 = vector.broadcast %c23_i32 : i32 to vector<1x25xi32>
    %37 = arith.cmpi eq, %20, %36 : vector<1x25xi32>
    %c24_i32 = arith.constant 24 : i32
    %38 = vector.broadcast %c24_i32 : i32 to vector<1x25xi32>
    %39 = arith.cmpi eq, %20, %38 : vector<1x25xi32>
    %40 = arith.ori %33, %35 : vector<1x25xi1>
    %41 = arith.ori %40, %37 : vector<1x25xi1>
    %42 = arith.ori %41, %39 : vector<1x25xi1>
    %cst_4 = arith.constant 1.000000e+00 : f32
    %43 = vector.shape_cast %31 : vector<1x25xi1> to vector<1x25xi1>
    %44 = vector.broadcast %43 : vector<1x25xi1> to vector<8x25xi1>
    %45 = vector.broadcast %cst_4 : f32 to vector<8x25xf32>
    %46 = arith.select %44, %19, %45 : vector<8x25xi1>, vector<8x25xf32>
    %47 = arith.divf %18, %46 : vector<8x25xf32>
    %cst_5 = arith.constant 0.000000e+00 : f32
    %48 = vector.broadcast %cst_5 : f32 to vector<8x25xf32>
    %49 = arith.cmpf ogt, %47, %48 : vector<8x25xf32>
    %cst_6 = arith.constant 0.000000e+00 : f32
    %50 = vector.broadcast %cst_6 : f32 to vector<8x25xf32>
    %51 = arith.cmpf olt, %47, %50 : vector<8x25xf32>
    %cst_7 = arith.constant -1.000000e+00 : f32
    %52 = vector.broadcast %cst_7 : f32 to vector<8x25xf32>
    %53 = arith.select %51, %52, %47 : vector<8x25xi1>, vector<8x25xf32>
    %cst_8 = arith.constant 1.000000e+00 : f32
    %54 = vector.broadcast %cst_8 : f32 to vector<8x25xf32>
    %55 = arith.select %49, %54, %53 : vector<8x25xi1>, vector<8x25xf32>
    %56 = vector.shape_cast %42 : vector<1x25xi1> to vector<1x25xi1>
    %57 = vector.broadcast %56 : vector<1x25xi1> to vector<8x25xi1>
    %58 = arith.select %57, %55, %47 : vector<8x25xi1>, vector<8x25xf32>
    %c0_9 = arith.constant 0 : index
    %c0_10 = arith.constant 0 : index
    %59 = vector.load %arg1[%c0_9, %c0_10] : memref<8x384xbf16, #tpu.memory_space<vmem>>, vector<8x384xbf16>
    %60 = vector.extract_strided_slice %59 {offsets = [0, 0], sizes = [8, 256], strides = [1, 1]} : vector<8x384xbf16> to vector<8x256xbf16>
    %61 = arith.truncf %14 : vector<8x1xf32> to vector<8x1xbf16>
    %62 = vector.broadcast %61 : vector<8x1xbf16> to vector<8x256xbf16>
    %63 = arith.mulf %60, %62 : vector<8x256xbf16>
    %64 = vector.extract_strided_slice %59 {offsets = [0, 256], sizes = [8, 128], strides = [1, 1]} : vector<8x384xbf16> to vector<8x128xbf16>
    %65 = arith.truncf %15 : vector<8x1xf32> to vector<8x1xbf16>
    %66 = vector.broadcast %65 : vector<8x1xbf16> to vector<8x128xbf16>
    %67 = arith.mulf %64, %66 : vector<8x128xbf16>
    %68 = tpu.concatenate %63, %67 in 1 : vector<8x256xbf16>, vector<8x128xbf16> -> vector<8x384xbf16>
    %c0_11 = arith.constant 0 : index
    %c0_12 = arith.constant 0 : index
    %69 = vector.load %arg4[%c0_11, %c0_12] : memref<384x20xbf16, #tpu.memory_space<vmem>>, vector<384x20xbf16>
    %cst_13 = arith.constant dense<0.000000e+00> : vector<8x20xf32>
    %70 = tpu.matmul %68, %69, %cst_13 {dimension_numbers = #tpu.dot_dimension_numbers<[1], [0], [0], [1], [0, 0, 1, 1], [], []>} : vector<8x384xbf16>, vector<384x20xbf16>, vector<8x20xf32> -> vector<8x20xf32>
    %c0_14 = arith.constant 0 : index
    %c0_15 = arith.constant 0 : index
    %71 = vector.load %arg5[%c0_14, %c0_15] : memref<25x20xf32, #tpu.memory_space<vmem>>, vector<25x20xf32>
    %cst_16 = arith.constant dense<0.000000e+00> : vector<8x20xf32>
    %72 = tpu.matmul %58, %71, %cst_16 {dimension_numbers = #tpu.dot_dimension_numbers<[1], [0], [0], [1], [0, 0, 1, 1], [], []>} : vector<8x25xf32>, vector<25x20xf32>, vector<8x20xf32> -> vector<8x20xf32>
    %73 = arith.addf %70, %72 : vector<8x20xf32>
    %c0_17 = arith.constant 0 : index
    %c0_18 = arith.constant 0 : index
    %74 = vector.load %arg6[%c0_17, %c0_18] : memref<1x20xf32, #tpu.memory_space<vmem>>, vector<1x20xf32>
    %75 = vector.broadcast %74 : vector<1x20xf32> to vector<8x20xf32>
    %76 = arith.addf %73, %75 : vector<8x20xf32>
    %cst_19 = arith.constant 0.000000e+00 : f32
    %77 = vector.broadcast %cst_19 : f32 to vector<8x20xf32>
    %78 = arith.maximumf %76, %77 : vector<8x20xf32>
    %79 = arith.truncf %78 : vector<8x20xf32> to vector<8x20xbf16>
    %c0_20 = arith.constant 0 : index
    %c0_21 = arith.constant 0 : index
    %80 = vector.load %arg7[%c0_20, %c0_21] : memref<20x16xbf16, #tpu.memory_space<vmem>>, vector<20x16xbf16>
    %cst_22 = arith.constant dense<0.000000e+00> : vector<8x16xf32>
    %81 = tpu.matmul %79, %80, %cst_22 {dimension_numbers = #tpu.dot_dimension_numbers<[1], [0], [0], [1], [0, 0, 1, 1], [], []>} : vector<8x20xbf16>, vector<20x16xbf16>, vector<8x16xf32> -> vector<8x16xf32>
    %c0_23 = arith.constant 0 : index
    %c0_24 = arith.constant 0 : index
    %82 = vector.load %arg8[%c0_23, %c0_24] : memref<1x16xf32, #tpu.memory_space<vmem>>, vector<1x16xf32>
    %83 = vector.broadcast %82 : vector<1x16xf32> to vector<8x16xf32>
    %84 = arith.addf %81, %83 : vector<8x16xf32>
    %cst_25 = arith.constant 0.000000e+00 : f32
    %85 = vector.broadcast %cst_25 : f32 to vector<8x16xf32>
    %86 = arith.maximumf %84, %85 : vector<8x16xf32>
    %c0_26 = arith.constant 0 : index
    %c0_27 = arith.constant 0 : index
    %87 = vector.load %arg9[%c0_26, %c0_27] : memref<1x16xf32, #tpu.memory_space<vmem>>, vector<1x16xf32>
    %88 = vector.broadcast %87 : vector<1x16xf32> to vector<8x16xf32>
    %89 = arith.mulf %86, %88 : vector<8x16xf32>
    %cst_28 = arith.constant dense<0.000000e+00> : vector<8xf32>
    %90 = vector.multi_reduction <add>, %89, %cst_28 [1] : vector<8x16xf32> to vector<8xf32>
    %91 = vector.shape_cast %90 : vector<8xf32> to vector<8x1xf32>
    %c0_29 = arith.constant 0 : index
    %c0_30 = arith.constant 0 : index
    %92 = vector.load %arg10[%c0_29, %c0_30] : memref<1x1xf32, #tpu.memory_space<vmem>>, vector<1x1xf32>
    %93 = vector.broadcast %92 : vector<1x1xf32> to vector<8x1xf32>
    %94 = arith.addf %91, %93 : vector<8x1xf32>
    %cst_31 = arith.constant 0.000000e+00 : f32
    %95 = vector.broadcast %cst_31 : f32 to vector<8x1xf32>
    %96 = arith.subf %95, %94 : vector<8x1xf32>
    %97 = math.exp %96 : vector<8x1xf32>
    %cst_32 = arith.constant 1.000000e+00 : f32
    %98 = vector.broadcast %cst_32 : f32 to vector<8x1xf32>
    %99 = arith.addf %98, %97 : vector<8x1xf32>
    %cst_33 = arith.constant 1.000000e+00 : f32
    %100 = vector.broadcast %cst_33 : f32 to vector<8x1xf32>
    %101 = arith.divf %100, %99 : vector<8x1xf32>
    %c0_34 = arith.constant 0 : index
    %c0_35 = arith.constant 0 : index
    %102 = vector.load %arg11[%c0_34, %c0_35] : memref<8x1xf32, #tpu.memory_space<vmem>>, vector<8x1xf32>
    tpu.vector_store %arg11[%c0_34, %c0_35], %101 {strides = array<i32>} : memref<8x1xf32, #tpu.memory_space<vmem>>, vector<8x1xf32>,
    return
  }
  func.func @transform_0(%arg0: i32) -> (i32, i32) {
    %c0_i32 = arith.constant 0 : i32
    %c0_i32_0 = arith.constant 0 : i32
    return %arg0, %c0_i32 : i32, i32
  }
  func.func @transform_1(%arg0: i32) -> (i32, i32) {
    %c0_i32 = arith.constant 0 : i32
    %c0_i32_0 = arith.constant 0 : i32
    return %arg0, %c0_i32 : i32, i32
  }
  func.func @transform_2(%arg0: i32) -> (i32, i32) {
    %c0_i32 = arith.constant 0 : i32
    %c0_i32_0 = arith.constant 0 : i32
    %c0_i32_1 = arith.constant 0 : i32
    return %c0_i32, %c0_i32_0 : i32, i32
  }
  func.func @transform_3(%arg0: i32) -> (i32, i32) {
    %c0_i32 = arith.constant 0 : i32
    %c0_i32_0 = arith.constant 0 : i32
    %c0_i32_1 = arith.constant 0 : i32
    return %c0_i32, %c0_i32_0 : i32, i32
  }
  func.func @transform_4(%arg0: i32) -> (i32, i32) {
    %c0_i32 = arith.constant 0 : i32
    %c0_i32_0 = arith.constant 0 : i32
    %c0_i32_1 = arith.constant 0 : i32
    return %c0_i32, %c0_i32_0 : i32, i32
  }
  func.func @transform_5(%arg0: i32) -> (i32, i32) {
    %c0_i32 = arith.constant 0 : i32
    %c0_i32_0 = arith.constant 0 : i32
    %c0_i32_1 = arith.constant 0 : i32
    return %c0_i32, %c0_i32_0 : i32, i32
  }
  func.func @transform_6(%arg0: i32) -> (i32, i32) {
    %c0_i32 = arith.constant 0 : i32
    %c0_i32_0 = arith.constant 0 : i32
    %c0_i32_1 = arith.constant 0 : i32
    return %c0_i32, %c0_i32_0 : i32, i32
  }
  func.func @transform_7(%arg0: i32) -> (i32, i32) {
    %c0_i32 = arith.constant 0 : i32
    %c0_i32_0 = arith.constant 0 : i32
    %c0_i32_1 = arith.constant 0 : i32
    return %c0_i32, %c0_i32_0 : i32, i32
  }
  func.func @transform_8(%arg0: i32) -> (i32, i32) {
    %c0_i32 = arith.constant 0 : i32
    %c0_i32_0 = arith.constant 0 : i32
    %c0_i32_1 = arith.constant 0 : i32
    return %c0_i32, %c0_i32_0 : i32, i32
  }
  func.func @transform_9(%arg0: i32) -> (i32, i32) {
    %c0_i32 = arith.constant 0 : i32
    %c0_i32_0 = arith.constant 0 : i32
    %c0_i32_1 = arith.constant 0 : i32
    return %c0_i32, %c0_i32_0 : i32, i32
  }
  func.func @transform_10(%arg0: i32) -> (i32, i32) {
    %c0_i32 = arith.constant 0 : i32
    %c0_i32_0 = arith.constant 0 : i32
    return %arg0, %c0_i32 : i32, i32
  }
}

</mosaic_0001>

<llo_original>
// kernel: classifier_mlp_forward.1
$region0: #{classifier_mlp_forward.1}
  #allocation0 [shape = 'u32[]', space=smem, size = 0x4, offset = 0x4, fixed_abs, tag = 'smem constant byte address 0x4 - core index']
  #allocation1 [shape = 'u32[144,128]{1,0:T(1,128)}', space=vmem, size = 0x12000, scoped, tag = 'internal scratch']
  #allocation2 [shape = 'f32[1,1]{1,0:T(1,128)S(1)}', space=vmem, size = 0x200, scoped, tag = 'scoped memory for classifier_mlp_forward.1']
  %s0 = inlined_call_operand.vmem [shape: bf16[16,384], index: 0, kind: input, shape index: {}]
  %s1 = inlined_call_operand.vmem [shape: f32[16,42], index: 1, kind: input, shape index: {}]
  %s2 = inlined_call_operand.vmem [shape: f32[42,50], index: 2, kind: input, shape index: {}]
  %s3 = inlined_call_operand.vmem [shape: bf16[384,20], index: 3, kind: input, shape index: {}]
  %s4 = inlined_call_operand.vmem [shape: f32[25,20], index: 4, kind: input, shape index: {}]
  %s5 = inlined_call_operand.vmem [shape: f32[1,20], index: 5, kind: input, shape index: {}]
  %s6 = inlined_call_operand.vmem [shape: bf16[20,16], index: 6, kind: input, shape index: {}]
  %s7 = inlined_call_operand.vmem [shape: f32[1,16], index: 7, kind: input, shape index: {}]
  %s8 = inlined_call_operand.vmem [shape: f32[1,16], index: 8, kind: input, shape index: {}]
  %s9 = inlined_call_operand.<no memory space> [shape: f32[1,1], index: 9, kind: input, shape index: {}]
  %s10 = inlined_call_operand.vmem [shape: f32[16,1], index: 10, kind: output, shape index: {}]
  %s11 = sld [smem:[#allocation0]]
  $region73: #{classifier_mlp_forward.1} parent=0
    _
  %s13 = ssub.s32 1, %s11
  %s14 = scalar_select 0, %s13, %s11
  %v15 = vstv %s9
  %16 = vst [vmem:[#allocation2] sm:$0x1] %v15
  loop: start=0, step=1, limit=4
  $region2: #{classifier_mlp_forward.1} parent=0 // loop_pre_header
    _
  $region3: #{classifier_mlp_forward.1} parent=0 // loop_header
    %s18 = sphi 0, %s22
    %p19 = scmp.ge.s32.totalorder %s18, 4
    %s28 = sphi 0, %s30
    %s31 = sphi 0, %s28
    %s32 = sphi 0, %s31
    %s48 = sphi 0, %s32
    %s54 = sphi 0, %s56
    %s57 = sphi 0, %s54
    %s58 = sphi 0, %s57
    %s74 = sphi 0, %s58
    %s78 = sphi 0, %s78
    %s80 = sphi 0, %s78
    %s81 = sphi 0, %s80
    %s95 = sphi 0, %s81
    %s99 = sphi 0, %s99
    %s101 = sphi 0, %s99
    %s102 = sphi 0, %s101
    %s116 = sphi 0, %s102
    %s120 = sphi 0, %s120
    %s122 = sphi 0, %s120
    %s123 = sphi 0, %s122
    %s137 = sphi 0, %s123
    %s141 = sphi 0, %s141
    %s143 = sphi 0, %s141
    %s144 = sphi 0, %s143
    %s158 = sphi 0, %s144
    %s162 = sphi 0, %s162
    %s164 = sphi 0, %s162
    %s165 = sphi 0, %s164
    %s179 = sphi 0, %s165
    %s183 = sphi 0, %s183
    %s185 = sphi 0, %s183
    %s186 = sphi 0, %s185
    %s200 = sphi 0, %s186
    %s204 = sphi 0, %s204
    %s206 = sphi 0, %s204
    %s207 = sphi 0, %s206
    %s221 = sphi 0, %s207
    %s225 = sphi 0, %s225
    %s227 = sphi 0, %s225
    %s228 = sphi 0, %s227
    %s242 = sphi 0, %s228
    %s248 = sphi 0, %s250
    %s251 = sphi 0, %s248
    %s252 = sphi 0, %s251
    %s268 = sphi 0, %s252
  $region4: #{classifier_mlp_forward.1} parent=0 // loop_header_branch
    %21 = sbr.rel (%p19) target = $region8
  $region5: #{classifier_mlp_forward.1} parent=0 // loop_body
    %s23 = ssub.s32 %s18, 1
    %s24 = ssub.s32 %s18, 2
    %s25 = sadd.s32 %s18, 1
    %s26 = ssub.s32 %s18, %s25
    %p27 = scmp.eq.s32.totalorder %s26, 0
    %s29 = sadd.s32 %s28, 1
    %s30 = scalar_select %p27, %s28, %s29
    %p33 = pneg %p27
    %p34 = scmp.eq.s32.totalorder %s18, 1
    %p35 = por %p33, %p34
    %p36 = scmp.ne.s32.totalorder %s28, %s31
    %p37 = scmp.eq.s32.totalorder %s18, 0
    %p38 = por %p36, %p37
    %p39 = scmp.ne.s32.totalorder %s28, %s31
    %p40 = scmp.eq.s32.totalorder %s23, 1
    %p41 = por %p39, %p40
    %p42 = scmp.ne.s32.totalorder %s31, %s32
    %p43 = scmp.eq.s32.totalorder %s23, 0
    %p44 = por %p42, %p43
    %p45 = scmp.ne.s32.totalorder %s31, %s32
    %p46 = scmp.eq.s32.totalorder %s24, 1
    %p47 = por %p45, %p46
    %p49 = scmp.ne.s32.totalorder %s32, %s48
    %p50 = scmp.eq.s32.totalorder %s24, 0
    %p51 = por %p49, %p50
    %s52 = ssub.s32 %s18, %s25
    %p53 = scmp.eq.s32.totalorder %s52, 0
    %s55 = sadd.s32 %s54, 1
    %s56 = scalar_select %p53, %s54, %s55
    %p59 = pneg %p53
    %p60 = scmp.eq.s32.totalorder %s18, 1
    %p61 = por %p59, %p60
    %p62 = scmp.ne.s32.totalorder %s54, %s57
    %p63 = scmp.eq.s32.totalorder %s18, 0
    %p64 = por %p62, %p63
    %p65 = scmp.ne.s32.totalorder %s54, %s57
    %p66 = scmp.eq.s32.totalorder %s23, 1
    %p67 = por %p65, %p66
    %p68 = scmp.ne.s32.totalorder %s57, %s58
    %p69 = scmp.eq.s32.totalorder %s23, 0
    %p70 = por %p68, %p69
    %p71 = scmp.ne.s32.totalorder %s57, %s58
    %p72 = scmp.eq.s32.totalorder %s24, 1
    %p73 = por %p71, %p72
    %p75 = scmp.ne.s32.totalorder %s58, %s74
    %p76 = scmp.eq.s32.totalorder %s24, 0
    %p77 = por %p75, %p76
    %s79 = sadd.s32 %s78, 1
    %p82 = scmp.eq.s32.totalorder %s18, 1
    %p83 = scmp.ne.s32.totalorder %s78, %s80
    %p84 = scmp.eq.s32.totalorder %s18, 0
    %p85 = por %p83, %p84
    %p86 = scmp.ne.s32.totalorder %s78, %s80
    %p87 = scmp.eq.s32.totalorder %s23, 1
    %p88 = por %p86, %p87
    %p89 = scmp.ne.s32.totalorder %s80, %s81
    %p90 = scmp.eq.s32.totalorder %s23, 0
    %p91 = por %p89, %p90
    %p92 = scmp.ne.s32.totalorder %s80, %s81
    %p93 = scmp.eq.s32.totalorder %s24, 1
    %p94 = por %p92, %p93
    %p96 = scmp.ne.s32.totalorder %s81, %s95
    %p97 = scmp.eq.s32.totalorder %s24, 0
    %p98 = por %p96, %p97
    %s100 = sadd.s32 %s99, 1
    %p103 = scmp.eq.s32.totalorder %s18, 1
    %p104 = scmp.ne.s32.totalorder %s99, %s101
    %p105 = scmp.eq.s32.totalorder %s18, 0
    %p106 = por %p104, %p105
    %p107 = scmp.ne.s32.totalorder %s99, %s101
    %p108 = scmp.eq.s32.totalorder %s23, 1
    %p109 = por %p107, %p108
    %p110 = scmp.ne.s32.totalorder %s101, %s102
    %p111 = scmp.eq.s32.totalorder %s23, 0
    %p112 = por %p110, %p111
    %p113 = scmp.ne.s32.totalorder %s101, %s102
    %p114 = scmp.eq.s32.totalorder %s24, 1
    %p115 = por %p113, %p114
    %p117 = scmp.ne.s32.totalorder %s102, %s116
    %p118 = scmp.eq.s32.totalorder %s24, 0
    %p119 = por %p117, %p118
    %s121 = sadd.s32 %s120, 1
    %p124 = scmp.eq.s32.totalorder %s18, 1
    %p125 = scmp.ne.s32.totalorder %s120, %s122
    %p126 = scmp.eq.s32.totalorder %s18, 0
    %p127 = por %p125, %p126
    %p128 = scmp.ne.s32.totalorder %s120, %s122
    %p129 = scmp.eq.s32.totalorder %s23, 1
    %p130 = por %p128, %p129
    %p131 = scmp.ne.s32.totalorder %s122, %s123
    %p132 = scmp.eq.s32.totalorder %s23, 0
    %p133 = por %p131, %p132
    %p134 = scmp.ne.s32.totalorder %s122, %s123
    %p135 = scmp.eq.s32.totalorder %s24, 1
    %p136 = por %p134, %p135
    %p138 = scmp.ne.s32.totalorder %s123, %s137
    %p139 = scmp.eq.s32.totalorder %s24, 0
    %p140 = por %p138, %p139
    %s142 = sadd.s32 %s141, 1
    %p145 = scmp.eq.s32.totalorder %s18, 1
    %p146 = scmp.ne.s32.totalorder %s141, %s143
    %p147 = scmp.eq.s32.totalorder %s18, 0
    %p148 = por %p146, %p147
    %p149 = scmp.ne.s32.totalorder %s141, %s143
    %p150 = scmp.eq.s32.totalorder %s23, 1
    %p151 = por %p149, %p150
    %p152 = scmp.ne.s32.totalorder %s143, %s144
    %p153 = scmp.eq.s32.totalorder %s23, 0
    %p154 = por %p152, %p153
    %p155 = scmp.ne.s32.totalorder %s143, %s144
    %p156 = scmp.eq.s32.totalorder %s24, 1
    %p157 = por %p155, %p156
    %p159 = scmp.ne.s32.totalorder %s144, %s158
    %p160 = scmp.eq.s32.totalorder %s24, 0
    %p161 = por %p159, %p160
    %s163 = sadd.s32 %s162, 1
    %p166 = scmp.eq.s32.totalorder %s18, 1
    %p167 = scmp.ne.s32.totalorder %s162, %s164
    %p168 = scmp.eq.s32.totalorder %s18, 0
    %p169 = por %p167, %p168
    %p170 = scmp.ne.s32.totalorder %s162, %s164
    %p171 = scmp.eq.s32.totalorder %s23, 1
    %p172 = por %p170, %p171
    %p173 = scmp.ne.s32.totalorder %s164, %s165
    %p174 = scmp.eq.s32.totalorder %s23, 0
    %p175 = por %p173, %p174
    %p176 = scmp.ne.s32.totalorder %s164, %s165
    %p177 = scmp.eq.s32.totalorder %s24, 1
    %p178 = por %p176, %p177
    %p180 = scmp.ne.s32.totalorder %s165, %s179
    %p181 = scmp.eq.s32.totalorder %s24, 0
    %p182 = por %p180, %p181
    %s184 = sadd.s32 %s183, 1
    %p187 = scmp.eq.s32.totalorder %s18, 1
    %p188 = scmp.ne.s32.totalorder %s183, %s185
    %p189 = scmp.eq.s32.totalorder %s18, 0
    %p190 = por %p188, %p189
    %p191 = scmp.ne.s32.totalorder %s183, %s185
    %p192 = scmp.eq.s32.totalorder %s23, 1
    %p193 = por %p191, %p192
    %p194 = scmp.ne.s32.totalorder %s185, %s186
    %p195 = scmp.eq.s32.totalorder %s23, 0
    %p196 = por %p194, %p195
    %p197 = scmp.ne.s32.totalorder %s185, %s186
    %p198 = scmp.eq.s32.totalorder %s24, 1
    %p199 = por %p197, %p198
    %p201 = scmp.ne.s32.totalorder %s186, %s200
    %p202 = scmp.eq.s32.totalorder %s24, 0
    %p203 = por %p201, %p202
    %s205 = sadd.s32 %s204, 1
    %p208 = scmp.eq.s32.totalorder %s18, 1
    %p209 = scmp.ne.s32.totalorder %s204, %s206
    %p210 = scmp.eq.s32.totalorder %s18, 0
    %p211 = por %p209, %p210
    %p212 = scmp.ne.s32.totalorder %s204, %s206
    %p213 = scmp.eq.s32.totalorder %s23, 1
    %p214 = por %p212, %p213
    %p215 = scmp.ne.s32.totalorder %s206, %s207
    %p216 = scmp.eq.s32.totalorder %s23, 0
    %p217 = por %p215, %p216
    %p218 = scmp.ne.s32.totalorder %s206, %s207
    %p219 = scmp.eq.s32.totalorder %s24, 1
    %p220 = por %p218, %p219
    %p222 = scmp.ne.s32.totalorder %s207, %s221
    %p223 = scmp.eq.s32.totalorder %s24, 0
    %p224 = por %p222, %p223
    %s226 = sadd.s32 %s225, 1
    %p229 = scmp.eq.s32.totalorder %s18, 1
    %p230 = scmp.ne.s32.totalorder %s225, %s227
    %p231 = scmp.eq.s32.totalorder %s18, 0
    %p232 = por %p230, %p231
    %p233 = scmp.ne.s32.totalorder %s225, %s227
    %p234 = scmp.eq.s32.totalorder %s23, 1
    %p235 = por %p233, %p234
    %p236 = scmp.ne.s32.totalorder %s227, %s228
    %p237 = scmp.eq.s32.totalorder %s23, 0
    %p238 = por %p236, %p237
    %p239 = scmp.ne.s32.totalorder %s227, %s228
    %p240 = scmp.eq.s32.totalorder %s24, 1
    %p241 = por %p239, %p240
    %p243 = scmp.ne.s32.totalorder %s228, %s242
    %p244 = scmp.eq.s32.totalorder %s24, 0
    %p245 = por %p243, %p244
    %s246 = ssub.s32 %s18, %s25
    %p247 = scmp.eq.s32.totalorder %s246, 0
    %s249 = sadd.s32 %s248, 1
    %s250 = scalar_select %p247, %s248, %s249
    %p253 = pneg %p247
    %p254 = scmp.eq.s32.totalorder %s18, 1
    %p255 = por %p253, %p254
    %p256 = scmp.ne.s32.totalorder %s248, %s251
    %p257 = scmp.eq.s32.totalorder %s18, 0
    %p258 = por %p256, %p257
    %p259 = scmp.ne.s32.totalorder %s248, %s251
    %p260 = scmp.eq.s32.totalorder %s23, 1
    %p261 = por %p259, %p260
    %p262 = scmp.ne.s32.totalorder %s251, %s252
    %p263 = scmp.eq.s32.totalorder %s23, 0
    %p264 = por %p262, %p263
    %p265 = scmp.ne.s32.totalorder %s251, %s252
    %p266 = scmp.eq.s32.totalorder %s24, 1
    %p267 = por %p265, %p266
    %p269 = scmp.ne.s32.totalorder %s252, %s268
    %p270 = scmp.eq.s32.totalorder %s24, 0
    %p271 = por %p269, %p270
    %p272 = scmp.le.s32.totalorder 1, %s18
    %p273 = scmp.lt.s32.totalorder %s18, 3
    %p274 = pnand %p272, %p273
    %p275 = pneg %p274
    // Predicated region
    $region9: #{classifier_mlp_forward.1} parent=5 // pred_check
      _
    $region10: #{classifier_mlp_forward.1} parent=5 // pred_check_branch
      %277 = sbr.rel (%p274) target = $region12
    $region11: #{classifier_mlp_forward.1} parent=5 // pred_region
      %s278 = ssub.s32 %s18, 1
      // Predicated region
      $region13: #{classifier_mlp_forward.1} parent=11 // pred_check
        %p279 = pneg %p91
      $region14: #{classifier_mlp_forward.1} parent=11 // pred_check_branch
        %281 = sbr.rel (%p279) target = $region16
      $region15: #{classifier_mlp_forward.1} parent=11 // pred_region
        _
      $region16: #{classifier_mlp_forward.1} parent=11 // pred_fallthru
        _
      // Predicated region
      $region17: #{classifier_mlp_forward.1} parent=11 // pred_check
        %p282 = pneg %p112
      $region18: #{classifier_mlp_forward.1} parent=11 // pred_check_branch
        %284 = sbr.rel (%p282) target = $region20
      $region19: #{classifier_mlp_forward.1} parent=11 // pred_region
        _
      $region20: #{classifier_mlp_forward.1} parent=11 // pred_fallthru
        _
      // Predicated region
      $region21: #{classifier_mlp_forward.1} parent=11 // pred_check
        %p285 = pneg %p133
      $region22: #{classifier_mlp_forward.1} parent=11 // pred_check_branch
        %287 = sbr.rel (%p285) target = $region24
      $region23: #{classifier_mlp_forward.1} parent=11 // pred_region
        _
      $region24: #{classifier_mlp_forward.1} parent=11 // pred_fallthru
        _
      // Predicated region
      $region25: #{classifier_mlp_forward.1} parent=11 // pred_check
        %p288 = pneg %p154
      $region26: #{classifier_mlp_forward.1} parent=11 // pred_check_branch
        %290 = sbr.rel (%p288) target = $region28
      $region27: #{classifier_mlp_forward.1} parent=11 // pred_region
        _
      $region28: #{classifier_mlp_forward.1} parent=11 // pred_fallthru
        _
      // Predicated region
      $region29: #{classifier_mlp_forward.1} parent=11 // pred_check
        %p291 = pneg %p175
      $region30: #{classifier_mlp_forward.1} parent=11 // pred_check_branch
        %293 = sbr.rel (%p291) target = $region32
      $region31: #{classifier_mlp_forward.1} parent=11 // pred_region
        _
      $region32: #{classifier_mlp_forward.1} parent=11 // pred_fallthru
        _
      // Predicated region
      $region33: #{classifier_mlp_forward.1} parent=11 // pred_check
        %p294 = pneg %p196
      $region34: #{classifier_mlp_forward.1} parent=11 // pred_check_branch
        %296 = sbr.rel (%p294) target = $region36
      $region35: #{classifier_mlp_forward.1} parent=11 // pred_region
        _
      $region36: #{classifier_mlp_forward.1} parent=11 // pred_fallthru
        _
      // Predicated region
      $region37: #{classifier_mlp_forward.1} parent=11 // pred_check
        %p297 = pneg %p217
      $region38: #{classifier_mlp_forward.1} parent=11 // pred_check_branch
        %299 = sbr.rel (%p297) target = $region40
      $region39: #{classifier_mlp_forward.1} parent=11 // pred_region
        _
      $region40: #{classifier_mlp_forward.1} parent=11 // pred_fallthru
        _
      // Predicated region
      $region41: #{classifier_mlp_forward.1} parent=11 // pred_check
        %p300 = pneg %p238
      $region42: #{classifier_mlp_forward.1} parent=11 // pred_check_branch
        %302 = sbr.rel (%p300) target = $region44
      $region43: #{classifier_mlp_forward.1} parent=11 // pred_region
        _
      $region44: #{classifier_mlp_forward.1} parent=11 // pred_fallthru
        _
    $region12: #{classifier_mlp_forward.1} parent=5 // pred_fallthru
      _
    %p303 = scmp.lt.s32.totalorder %s18, 2
    // Predicated region
    $region45: #{classifier_mlp_forward.1} parent=5 // pred_check
      %p304 = pneg %p303
    $region46: #{classifier_mlp_forward.1} parent=5 // pred_check_branch
      %306 = sbr.rel (%p304) target = $region48
    $region47: #{classifier_mlp_forward.1} parent=5 // pred_region
      // Predicated region
      $region49: #{classifier_mlp_forward.1} parent=47 // pred_check
        %p307 = pneg %p38
      $region50: #{classifier_mlp_forward.1} parent=47 // pred_check_branch
        %309 = sbr.rel (%p307) target = $region52
      $region51: #{classifier_mlp_forward.1} parent=47 // pred_region
        %p310 = scmp.lt.s32.totalorder %s18, 1
        %s311 = scalar_select %p310, %s18, 1
        %s312 = smul.addr %s311, 3
        %s313 = smul.addr %s312, 4
        %s314 = scalar_lea.vmem %s0, %s313
      $region52: #{classifier_mlp_forward.1} parent=47 // pred_fallthru
        _
      // Predicated region
      $region53: #{classifier_mlp_forward.1} parent=47 // pred_check
        %p315 = pneg %p64
      $region54: #{classifier_mlp_forward.1} parent=47 // pred_check_branch
        %317 = sbr.rel (%p315) target = $region56
      $region55: #{classifier_mlp_forward.1} parent=47 // pred_region
        %p318 = scmp.lt.s32.totalorder %s18, 1
        %s319 = scalar_select %p318, %s18, 1
        %s320 = smul.addr %s319, 8
        %s321 = scalar_lea.vmem %s1, %s320
      $region56: #{classifier_mlp_forward.1} parent=47 // pred_fallthru
        _
    $region48: #{classifier_mlp_forward.1} parent=5 // pred_fallthru
      _
    %p322 = scmp.le.s32.totalorder 1, %s18
    %p323 = scmp.lt.s32.totalorder %s18, 3
    %p324 = pnand %p322, %p323
    %p325 = pneg %p324
    // Predicated region
    $region57: #{classifier_mlp_forward.1} parent=5 // pred_check
      _
    $region58: #{classifier_mlp_forward.1} parent=5 // pred_check_branch
      %327 = sbr.rel (%p324) target = $region60
    $region59: #{classifier_mlp_forward.1} parent=5 // pred_region
      %s328 = ssub.s32 %s18, 1
      %p329 = scmp.lt.s32.totalorder %s23, 1
      %s330 = scalar_select %p329, %s23, 1
      %s331 = smul.addr %s330, 3
      %s332 = smul.addr %s331, 4
      %s333 = scalar_lea.vmem %s0, %s332
      %p334 = pneg %p44
      %p335 = pneg %p41
      %p336 = scmp.lt.s32.totalorder %s23, 1
      %s337 = scalar_select %p336, %s23, 1
      %s338 = smul.addr %s337, 8
      %s339 = scalar_lea.vmem %s1, %s338
      %p340 = pneg %p70
      %p341 = pneg %p67
      %p342 = pneg %p91
      %p343 = pneg %p88
      %p344 = pneg %p112
      %p345 = pneg %p109
      %p346 = pneg %p133
      %p347 = pneg %p130
      %p348 = pneg %p154
      %p349 = pneg %p151
      %p350 = pneg %p175
      %p351 = pneg %p172
      %p352 = pneg %p196
      %p353 = pneg %p193
      %p354 = pneg %p217
      %p355 = pneg %p214
      %p356 = pneg %p238
      %p357 = pneg %p235
      %p358 = pneg %p264
      %p359 = pneg %p261
      %p360 = scmp.lt.s32.totalorder %s23, 1
      %s361 = scalar_select %p360, %s23, 1
      %s362 = smul.addr %s361, 8
      %s363 = scalar_lea.vmem %s10, %s362
      %p364 = scmp.lt.s32.totalorder %s23, 1
      %s365 = scalar_select %p364, %s23, 1
      %s366 = smul.addr %s365, 3
      %s367 = smul.addr %s366, 4
      %s368 = scalar_lea.vmem %s0, %s367
      %p369 = scmp.lt.s32.totalorder %s23, 1
      %s370 = scalar_select %p369, %s23, 1
      %s371 = smul.addr %s370, 8
      %s372 = scalar_lea.vmem %s1, %s371
      %p373 = scmp.lt.s32.totalorder %s23, 1
      %s374 = scalar_select %p373, %s23, 1
      %s375 = smul.addr %s374, 8
      %s376 = scalar_lea.vmem %s10, %s375
      %v378 = vld [vmem:[%s372] sm:$0xff]
      %vm379 = vcmask 80944
      %v380 = vsel %vm379, %v378, -inf
      %381 = vmax.xlane.f32.xlu0 %v380
      %v382 = vpop.xlane.xlu0 %381
      %v383 = vsub.f32 %v378, %v382
      %v384 = vmul.f32 %v383, 1.442695
      %v385 = vpow.pop %v384
      %387 = vrot.lane.b32.xlu0 %v385, 125
      %v388 = vpop.permute.xlu0 %387
      %v390 = vadd.f32 %v385, %v388
      %391 = vrot.lane.b32.xlu0 %v385, 127
      %v392 = vpop.permute.xlu0 %391
      %v394 = vadd.f32 %v385, %v392
      %396 = vrot.lane.b32.xlu0 %v394, 127
      %v397 = vpop.permute.xlu0 %396
      %v399 = vadd.f32 %v390, %v397
      %v400 = vrcp.pop %v399
      %v401 = vmul.f32 %v390, %v400
      %403 = vrot.lane.b32.xlu0 %v399, 1
      %v404 = vpop.permute.xlu0 %403
      %v406 = vrcp.pop %v404
      %v407 = vmul.f32 %v394, %v406
      %v408 = vld [vmem:[%s2] sm:$0xff]
      %v409 = vld [vmem:[%s2 + $0x8] sm:$0xff]
      %v410 = vld [vmem:[%s2 + $0x10] sm:$0xff]
      %v411 = vld [vmem:[%s2 + $0x18] sm:$0xff]
      %v412 = vld [vmem:[%s2 + $0x20] sm:$0xff]
      %v413 = vld [vmem:[%s2 + $0x28] sm:$0x3]
      %vm414 = vcmask 343040
      %v416 = vsel %vm414, %v378, 0
      %vm418 = vcmask 1041408
      %v420 = vsel %vm418, %v413, 0
      %422 = vmatprep.subr.mxu0 0.0
      %423 = vmatpush1.msra.mxu0 %v408
      %424 = vmatprep.subr.mxu0 0.0
      %425 = vmatpush1.msra.mxu0 %v409
      %426 = vmatprep.subr.mxu0 0.0
      %427 = vmatpush1.msra.mxu0 %v410
      %428 = vmatprep.subr.mxu0 0.0
      %429 = vmatpush1.msra.mxu0 %v411
      %430 = vmatprep.subr.mxu0 0.0
      %431 = vmatpush1.msra.mxu0 %v412
      %432 = vmatprep.subr.mxu0 0.0
      %433 = vmatpush1.msra.mxu0 %v420
      %434 = vmatprep.subr.mxu0 0.0
      %435 = vmatpush1.msra.mxu0 0.0
      %436 = vmatprep.subr.mxu0 0.0
      %437 = vmatpush1.msra.mxu0 0.0
      %438 = vmatprep.subr.mxu0 0.0
      %439 = vmatpush1.msra.mxu0 0.0
      %440 = vmatprep.subr.mxu0 0.0
      %441 = vmatpush1.msra.mxu0 0.0
      %442 = vmatprep.subr.mxu0 0.0
      %443 = vmatpush1.msra.mxu0 0.0
      %444 = vmatprep.subr.mxu0 0.0
      %445 = vmatpush1.msra.mxu0 0.0
      %446 = vmatprep.subr.mxu0 0.0
      %447 = vmatpush1.msra.mxu0 0.0
      %448 = vmatprep.subr.mxu0 0.0
      %449 = vmatpush1.msra.mxu0 0.0
      %450 = vmatprep.subr.mxu0 0.0
      %451 = vmatpush1.msra.mxu0 0.0
      %452 = vmatprep.subr.mxu0 0.0
      %453 = vmatpush1.msra.mxu0 0.0
      %454 = vmatprep.subr.mxu0 0.0
      %455 = vmatpush1.msra.mxu0 0.0
      %456 = vmatprep.subr.mxu0 0.0
      %457 = vmatpush1.msra.mxu0 0.0
      %458 = vmatprep.subr.mxu0 0.0
      %459 = vmatpush1.msra.mxu0 0.0
      %460 = vmatprep.subr.mxu0 0.0
      %461 = vmatpush1.msra.mxu0 0.0
      %462 = vmatprep.subr.mxu0 0.0
      %463 = vmatpush1.msra.mxu0 0.0
      %464 = vmatprep.subr.mxu0 0.0
      %465 = vmatpush1.msra.mxu0 0.0
      %466 = vmatprep.subr.mxu0 0.0
      %467 = vmatpush1.msra.mxu0 0.0
      %468 = vmatprep.subr.mxu0 0.0
      %469 = vmatpush1.msra.mxu0 0.0
      %470 = vmatprep.subr.mxu0 0.0
      %471 = vmatpush1.msra.mxu0 0.0
      %472 = vmatprep.subr.mxu0 0.0
      %473 = vmatpush1.msra.mxu0 0.0
      %474 = vmatprep.subr.mxu0 0.0
      %475 = vmatpush1.msra.mxu0 0.0
      %476 = vmatprep.subr.mxu0 0.0
      %477 = vmatpush1.msra.mxu0 0.0
      %478 = vmatprep.subr.mxu0 0.0
      %479 = vmatpush1.msra.mxu0 0.0
      %480 = vmatprep.subr.mxu0 0.0
      %481 = vmatpush1.msra.mxu0 0.0
      %482 = vmatprep.subr.mxu0 0.0
      %483 = vmatpush1.msra.mxu0 0.0
      %484 = vmatprep.subr.mxu0 0.0
      %485 = vmatpush1.msra.mxu0 0.0
      %486 = vmatprep.mubr.f32.mxu0 0.0
      %487 = vmatmul.mubr.f32.gmra.mrb[0].mxu0 %v416
      %v488 = vpop.f32.mrb[0].mxu0
      %v489 = vadd.f32 0.0, %v488
      %v490 = vpop.f32.mrb[0].mxu0
      %491 = vdwg.mxu0
      %v492 = vlaneseq
      %v493 = vand.u32 %v492, 127
      %vm494 = vcmp.eq.s32.totalorder %v493, 9
      %vm495 = vcmp.eq.s32.totalorder %v493, 10
      %vm496 = vcmp.eq.s32.totalorder %v493, 11
      %vm497 = vcmp.eq.s32.totalorder %v493, 16
      %vm498 = vmor %vm494, %vm495
      %vm499 = vmor %vm498, %vm496
      %vm500 = vmor %vm499, %vm497
      %vm501 = vcmp.eq.s32.totalorder %v493, 21
      %vm502 = vcmp.eq.s32.totalorder %v493, 22
      %vm503 = vcmp.eq.s32.totalorder %v493, 23
      %vm504 = vcmp.eq.s32.totalorder %v493, 24
      %vm505 = vmor %vm501, %vm502
      %vm506 = vmor %vm505, %vm503
      %vm507 = vmor %vm506, %vm504
      %v508 = vsel %vm500, 1, 0
      %vm509 = vcmp.eq.s32.totalorder %v508, 1
      %511 = vrot.lane.b32.xlu0 %v489, 103
      %v512 = vpop.permute.xlu0 %511
      %v514 = vsel %vm509, %v512, 1.0
      %v515 = vrcp.pop %v514
      %v516 = vmul.f32 %v489, %v515
      %vm517 = vcmp.gt.f32.partialorder %v516, 0.0
      %vm518 = vcmp.lt.f32.partialorder %v516, 0.0
      %v519 = vsel %vm518, -1.0, %v516
      %v520 = vsel %vm517, 1.0, %v519
      %v521 = vsel %vm507, 1, 0
      %vm522 = vcmp.eq.s32.totalorder %v521, 1
      %v523 = vsel %vm522, %v520, %v516
      %v524 = vld [vmem:[%s368] sm:$0xff]
      %v525 = vld [vmem:[%s368 + $0x8] sm:$0xf]
      %v526 = vpack.c.bf16 %v401, %v401
      %528 = vset.pattern.permute.xlu0 6
      %529 = vperm.xlu0 %528, %v526
      %v530 = vpop.permute.xlu0 %529
      %v533 = vunpack.c.l.s4 839922192
      %v534 = vunpack.c.0.s8 %v533
      %v535 = vlaneseq
      %v536 = vshrl.u32 %v535, 7
      %v537 = vsub.s32 %v534, %v536
      %v538 = vrot.slane %v530, %v537
      %v540 = vmul.bf16 %v524, %v538
      %v541 = vpack.c.bf16 %v407, %v407
      %543 = vset.pattern.permute.xlu0 7
      %544 = vperm.xlu0 %543, %v541
      %v545 = vpop.permute.xlu0 %544
      %v547 = vmul.bf16 %v525, %v545
      %v549 = vunpack.c.l.b16 %v540
      %v550 = vunpack.c.h.b16 %v540
      %v551 = vpack.c.b16 %v549, %v549
      %v552 = vpack.c.b16 %v550, %v550
      %v555 = vld [vmem:[%s3] sm:$0xf]
      %v556 = vld [vmem:[%s3 + $0x4] sm:$0xf]
      %v557 = vld [vmem:[%s3 + $0x8] sm:$0xf]
      %v558 = vld [vmem:[%s3 + $0xc] sm:$0xf]
      %v559 = vld [vmem:[%s3 + $0x10] sm:$0xf]
      %v560 = vld [vmem:[%s3 + $0x14] sm:$0xf]
      %v561 = vld [vmem:[%s3 + $0x18] sm:$0xf]
      %v562 = vld [vmem:[%s3 + $0x1c] sm:$0xf]
      %v563 = vld [vmem:[%s3 + $0x20] sm:$0xf]
      %v564 = vld [vmem:[%s3 + $0x24] sm:$0xf]
      %v565 = vld [vmem:[%s3 + $0x28] sm:$0xf]
      %v566 = vld [vmem:[%s3 + $0x2c] sm:$0xf]
      %v567 = vld [vmem:[%s3 + $0x30] sm:$0xf]
      %v568 = vld [vmem:[%s3 + $0x34] sm:$0xf]
      %v569 = vld [vmem:[%s3 + $0x38] sm:$0xf]
      %v570 = vld [vmem:[%s3 + $0x3c] sm:$0xf]
      %v571 = vld [vmem:[%s3 + $0x40] sm:$0xf]
      %v572 = vld [vmem:[%s3 + $0x44] sm:$0xf]
      %v573 = vld [vmem:[%s3 + $0x48] sm:$0xf]
      %v574 = vld [vmem:[%s3 + $0x4c] sm:$0xf]
      %v575 = vld [vmem:[%s3 + $0x50] sm:$0xf]
      %v576 = vld [vmem:[%s3 + $0x54] sm:$0xf]
      %v577 = vld [vmem:[%s3 + $0x58] sm:$0xf]
      %v578 = vld [vmem:[%s3 + $0x5c] sm:$0xf]
      %v579 = vld [vmem:[%s3 + $0x60] sm:$0xf]
      %v580 = vld [vmem:[%s3 + $0x64] sm:$0xf]
      %v581 = vld [vmem:[%s3 + $0x68] sm:$0xf]
      %v582 = vld [vmem:[%s3 + $0x6c] sm:$0xf]
      %v583 = vld [vmem:[%s3 + $0x70] sm:$0xf]
      %v584 = vld [vmem:[%s3 + $0x74] sm:$0xf]
      %v585 = vld [vmem:[%s3 + $0x78] sm:$0xf]
      %v586 = vld [vmem:[%s3 + $0x7c] sm:$0xf]
      %v587 = vld [vmem:[%s3 + $0x80] sm:$0xf]
      %v588 = vld [vmem:[%s3 + $0x84] sm:$0xf]
      %v589 = vld [vmem:[%s3 + $0x88] sm:$0xf]
      %v590 = vld [vmem:[%s3 + $0x8c] sm:$0xf]
      %v591 = vld [vmem:[%s3 + $0x90] sm:$0xf]
      %v592 = vld [vmem:[%s3 + $0x94] sm:$0xf]
      %v593 = vld [vmem:[%s3 + $0x98] sm:$0xf]
      %v594 = vld [vmem:[%s3 + $0x9c] sm:$0xf]
      %v595 = vld [vmem:[%s3 + $0xa0] sm:$0xf]
      %v596 = vld [vmem:[%s3 + $0xa4] sm:$0xf]
      %v597 = vld [vmem:[%s3 + $0xa8] sm:$0xf]
      %v598 = vld [vmem:[%s3 + $0xac] sm:$0xf]
      %v599 = vld [vmem:[%s3 + $0xb0] sm:$0xf]
      %v600 = vld [vmem:[%s3 + $0xb4] sm:$0xf]
      %v601 = vld [vmem:[%s3 + $0xb8] sm:$0xf]
      %v602 = vld [vmem:[%s3 + $0xbc] sm:$0xf]
      %v603 = vld [vmem:[%s4] sm:$0xff]
      %v604 = vld [vmem:[%s4 + $0x8] sm:$0xff]
      %v605 = vld [vmem:[%s4 + $0x10] sm:$0xff]
      %v606 = vld [vmem:[%s4 + $0x18] sm:$0x1]
      %vm607 = vcmask 203776
      %v609 = vsel %vm607, %v523, 0
      %vm611 = vcmask 1040384
      %v613 = vsel %vm611, %v606, 0
      %615 = vmatprep.subr.mxu0 0.0
      %616 = vmatpush1.msra.mxu0 %v603
      %617 = vmatprep.subr.mxu0 0.0
      %618 = vmatpush1.msra.mxu0 %v604
      %619 = vmatprep.subr.mxu0 0.0
      %620 = vmatpush1.msra.mxu0 %v605
      %621 = vmatprep.subr.mxu0 0.0
      %622 = vmatpush1.msra.mxu0 %v613
      %623 = vmatprep.subr.mxu0 0.0
      %624 = vmatpush1.msra.mxu0 0.0
      %625 = vmatprep.subr.mxu0 0.0
      %626 = vmatpush1.msra.mxu0 0.0
      %627 = vmatprep.subr.mxu0 0.0
      %628 = vmatpush1.msra.mxu0 0.0
      %629 = vmatprep.subr.mxu0 0.0
      %630 = vmatpush1.msra.mxu0 0.0
      %631 = vmatprep.subr.mxu0 0.0
      %632 = vmatpush1.msra.mxu0 0.0
      %633 = vmatprep.subr.mxu0 0.0
      %634 = vmatpush1.msra.mxu0 0.0
      %635 = vmatprep.subr.mxu0 0.0
      %636 = vmatpush1.msra.mxu0 0.0
      %637 = vmatprep.subr.mxu0 0.0
      %638 = vmatpush1.msra.mxu0 0.0
      %639 = vmatprep.subr.mxu0 0.0
      %640 = vmatpush1.msra.mxu0 0.0
      %641 = vmatprep.subr.mxu0 0.0
      %642 = vmatpush1.msra.mxu0 0.0
      %643 = vmatprep.subr.mxu0 0.0
      %644 = vmatpush1.msra.mxu0 0.0
      %645 = vmatprep.subr.mxu0 0.0
      %646 = vmatpush1.msra.mxu0 0.0
      %647 = vmatprep.subr.mxu0 0.0
      %648 = vmatpush1.msra.mxu0 0.0
      %649 = vmatprep.subr.mxu0 0.0
      %650 = vmatpush1.msra.mxu0 0.0
      %651 = vmatprep.subr.mxu0 0.0
      %652 = vmatpush1.msra.mxu0 0.0
      %653 = vmatprep.subr.mxu0 0.0
      %654 = vmatpush1.msra.mxu0 0.0
      %655 = vmatprep.subr.mxu0 0.0
      %656 = vmatpush1.msra.mxu0 0.0
      %657 = vmatprep.subr.mxu0 0.0
      %658 = vmatpush1.msra.mxu0 0.0
      %659 = vmatprep.subr.mxu0 0.0
      %660 = vmatpush1.msra.mxu0 0.0
      %661 = vmatprep.subr.mxu0 0.0
      %662 = vmatpush1.msra.mxu0 0.0
      %663 = vmatprep.subr.mxu0 0.0
      %664 = vmatpush1.msra.mxu0 0.0
      %665 = vmatprep.subr.mxu0 0.0
      %666 = vmatpush1.msra.mxu0 0.0
      %667 = vmatprep.subr.mxu0 0.0
      %668 = vmatpush1.msra.mxu0 0.0
      %669 = vmatprep.subr.mxu0 0.0
      %670 = vmatpush1.msra.mxu0 0.0
      %671 = vmatprep.subr.mxu0 0.0
      %672 = vmatpush1.msra.mxu0 0.0
      %673 = vmatprep.subr.mxu0 0.0
      %674 = vmatpush1.msra.mxu0 0.0
      %675 = vmatprep.subr.mxu0 0.0
      %676 = vmatpush1.msra.mxu0 0.0
      %677 = vmatprep.subr.mxu0 0.0
      %678 = vmatpush1.msra.mxu0 0.0
      %679 = vmatprep.mubr.f32.mxu0 0.0
      %680 = vmatmul.mubr.f32.gmra.mrb[0].mxu0 %v609
      %v681 = vpop.f32.mrb[0].mxu0
      %v682 = vadd.f32 0.0, %v681
      %v683 = vpop.f32.mrb[0].mxu0
      %684 = vdwg.mxu0
      %v733 = vunpack.c.l.b16 %v555
      %v734 = vunpack.c.l.b16 %v556
      %v735 = vunpack.c.l.b16 %v557
      %v736 = vunpack.c.l.b16 %v558
      %v737 = vunpack.c.l.b16 %v559
      %v738 = vunpack.c.l.b16 %v560
      %v739 = vunpack.c.l.b16 %v561
      %v740 = vunpack.c.l.b16 %v562
      %v741 = vunpack.c.l.b16 %v563
      %v742 = vunpack.c.l.b16 %v564
      %v743 = vunpack.c.l.b16 %v565
      %v744 = vunpack.c.l.b16 %v566
      %v745 = vunpack.c.l.b16 %v567
      %v746 = vunpack.c.l.b16 %v568
      %v747 = vunpack.c.l.b16 %v569
      %v748 = vunpack.c.l.b16 %v570
      %v749 = vunpack.c.l.b16 %v571
      %v750 = vunpack.c.l.b16 %v572
      %v751 = vunpack.c.l.b16 %v573
      %v752 = vunpack.c.l.b16 %v574
      %v753 = vunpack.c.l.b16 %v575
      %v754 = vunpack.c.l.b16 %v576
      %v755 = vunpack.c.l.b16 %v577
      %v756 = vunpack.c.l.b16 %v578
      %v757 = vunpack.c.l.b16 %v579
      %v758 = vunpack.c.l.b16 %v580
      %v759 = vunpack.c.l.b16 %v581
      %v760 = vunpack.c.l.b16 %v582
      %v761 = vunpack.c.l.b16 %v583
      %v762 = vunpack.c.l.b16 %v584
      %v763 = vunpack.c.l.b16 %v585
      %v764 = vunpack.c.l.b16 %v586
      %v765 = vunpack.c.l.b16 %v587
      %v766 = vunpack.c.l.b16 %v588
      %v767 = vunpack.c.l.b16 %v589
      %v768 = vunpack.c.l.b16 %v590
      %v769 = vunpack.c.l.b16 %v591
      %v770 = vunpack.c.l.b16 %v592
      %v771 = vunpack.c.l.b16 %v593
      %v772 = vunpack.c.l.b16 %v594
      %v773 = vunpack.c.l.b16 %v595
      %v774 = vunpack.c.l.b16 %v596
      %v775 = vunpack.c.l.b16 %v597
      %v776 = vunpack.c.l.b16 %v598
      %v777 = vunpack.c.l.b16 %v599
      %v778 = vunpack.c.l.b16 %v600
      %v779 = vunpack.c.l.b16 %v601
      %v780 = vunpack.c.l.b16 %v602
      %v781 = vpack.c.b16 %v734, %v733
      %v782 = vpack.c.b16 %v736, %v735
      %v783 = vpack.c.b16 %v738, %v737
      %v784 = vpack.c.b16 %v740, %v739
      %v785 = vpack.c.b16 %v742, %v741
      %v786 = vpack.c.b16 %v744, %v743
      %v787 = vpack.c.b16 %v746, %v745
      %v788 = vpack.c.b16 %v748, %v747
      %v789 = vpack.c.b16 %v750, %v749
      %v790 = vpack.c.b16 %v752, %v751
      %v791 = vpack.c.b16 %v754, %v753
      %v792 = vpack.c.b16 %v756, %v755
      %v793 = vpack.c.b16 %v758, %v757
      %v794 = vpack.c.b16 %v760, %v759
      %v795 = vpack.c.b16 %v762, %v761
      %v796 = vpack.c.b16 %v764, %v763
      %v797 = vpack.c.b16 %v766, %v765
      %v798 = vpack.c.b16 %v768, %v767
      %v799 = vpack.c.b16 %v770, %v769
      %v800 = vpack.c.b16 %v772, %v771
      %v801 = vpack.c.b16 %v774, %v773
      %v802 = vpack.c.b16 %v776, %v775
      %v803 = vpack.c.b16 %v778, %v777
      %v804 = vpack.c.b16 %v780, %v779
      %829 = vmatprep.subr.bf16.mxu0 0
      %830 = vmatpush1.bf16.msra.mxu0 %v781
      %831 = vmatprep.subr.bf16.mxu0 0
      %832 = vmatpush1.bf16.msra.mxu0 %v782
      %833 = vmatprep.subr.bf16.mxu0 0
      %834 = vmatpush1.bf16.msra.mxu0 %v783
      %835 = vmatprep.subr.bf16.mxu0 0
      %836 = vmatpush1.bf16.msra.mxu0 %v784
      %837 = vmatprep.subr.bf16.mxu0 0
      %838 = vmatpush1.bf16.msra.mxu0 %v785
      %839 = vmatprep.subr.bf16.mxu0 0
      %840 = vmatpush1.bf16.msra.mxu0 %v786
      %841 = vmatprep.subr.bf16.mxu0 0
      %842 = vmatpush1.bf16.msra.mxu0 %v787
      %843 = vmatprep.subr.bf16.mxu0 0
      %844 = vmatpush1.bf16.msra.mxu0 %v788
      %845 = vmatprep.subr.bf16.mxu0 0
      %846 = vmatpush1.bf16.msra.mxu0 %v789
      %847 = vmatprep.subr.bf16.mxu0 0
      %848 = vmatpush1.bf16.msra.mxu0 %v790
      %849 = vmatprep.subr.bf16.mxu0 0
      %850 = vmatpush1.bf16.msra.mxu0 %v791
      %851 = vmatprep.subr.bf16.mxu0 0
      %852 = vmatpush1.bf16.msra.mxu0 %v792
      %853 = vmatprep.subr.bf16.mxu0 0
      %854 = vmatpush1.bf16.msra.mxu0 %v793
      %855 = vmatprep.subr.bf16.mxu0 0
      %856 = vmatpush1.bf16.msra.mxu0 %v794
      %857 = vmatprep.subr.bf16.mxu0 0
      %858 = vmatpush1.bf16.msra.mxu0 %v795
      %859 = vmatprep.subr.bf16.mxu0 0
      %860 = vmatpush1.bf16.msra.mxu0 %v796
      %861 = vmatprep.mubr.bf16.mxu0 %v552
      %862 = vmatmul.mubr.bf16.gmra.mrb[0].mxu0 %v551
      %v863 = vpop.f32.mrb[0].mxu0
      %v864 = vadd.f32 %v682, %v863
      %v865 = vpop.f32.mrb[0].mxu0
      %v866 = vpop.f32.mrb[0].mxu0
      %v867 = vpop.f32.mrb[0].mxu0
      %868 = vdwg.mxu0
      %869 = vmatprep.subr.bf16.mxu0 0
      %870 = vmatpush1.bf16.msra.mxu0 %v797
      %871 = vmatprep.subr.bf16.mxu0 0
      %872 = vmatpush1.bf16.msra.mxu0 %v798
      %873 = vmatprep.subr.bf16.mxu0 0
      %874 = vmatpush1.bf16.msra.mxu0 %v799
      %875 = vmatprep.subr.bf16.mxu0 0
      %876 = vmatpush1.bf16.msra.mxu0 %v800
      %877 = vmatprep.subr.bf16.mxu0 0
      %878 = vmatpush1.bf16.msra.mxu0 %v801
      %879 = vmatprep.subr.bf16.mxu0 0
      %880 = vmatpush1.bf16.msra.mxu0 %v802
      %881 = vmatprep.subr.bf16.mxu0 0
      %882 = vmatpush1.bf16.msra.mxu0 %v803
      %883 = vmatprep.subr.bf16.mxu0 0
      %884 = vmatpush1.bf16.msra.mxu0 %v804
      %885 = vmatprep.subr.bf16.mxu0 0
      %886 = vmatpush1.bf16.msra.mxu0 0
      %887 = vmatprep.subr.bf16.mxu0 0
      %888 = vmatpush1.bf16.msra.mxu0 0
      %889 = vmatprep.subr.bf16.mxu0 0
      %890 = vmatpush1.bf16.msra.mxu0 0
      %891 = vmatprep.subr.bf16.mxu0 0
      %892 = vmatpush1.bf16.msra.mxu0 0
      %893 = vmatprep.subr.bf16.mxu0 0
      %894 = vmatpush1.bf16.msra.mxu0 0
      %895 = vmatprep.subr.bf16.mxu0 0
      %896 = vmatpush1.bf16.msra.mxu0 0
      %897 = vmatprep.subr.bf16.mxu0 0
      %898 = vmatpush1.bf16.msra.mxu0 0
      %899 = vmatprep.subr.bf16.mxu0 0
      %900 = vmatpush1.bf16.msra.mxu0 0
      %901 = vmatprep.mubr.bf16.mxu0 0
      %902 = vmatmul.mubr.bf16.gmra.mrb[0].mxu0 %v547
      %v903 = vpop.f32.mrb[0].mxu0
      %v904 = vadd.f32 %v864, %v903
      %v905 = vpop.f32.mrb[0].mxu0
      %v906 = vpop.f32.mrb[0].mxu0
      %v907 = vpop.f32.mrb[0].mxu0
      %908 = vdwg.mxu0
      %v909 = vld [vmem:[%s5] sm:$0x1]
      %v911 = vlaneseq
      %v912 = vshrl.u32 %v911, 7
      %v913 = vsub.s32 0, %v912
      %v914 = vrot.slane %v909, %v913
      %v916 = vadd.f32 %v904, %v914
      %v917 = vmax.f32 %v916, 0.0
      %v918 = vpack.c.bf16 %v917, %v917
      %v919 = vld [vmem:[%s6] sm:$0xf]
      %v920 = vld [vmem:[%s6 + $0x4] sm:$0xf]
      %v921 = vld [vmem:[%s6 + $0x8] sm:$0x3]
      %v922 = vld [vmem:[%s7] sm:$0x1]
      %v924 = vlaneseq
      %v925 = vshrl.u32 %v924, 7
      %v926 = vsub.s32 0, %v925
      %v927 = vrot.slane %v922, %v926
      %v932 = vunpack.c.l.b16 %v919
      %v933 = vunpack.c.l.b16 %v920
      %v934 = vunpack.c.l.b16 %v921
      %v935 = vpack.c.b16 %v933, %v932
      %v936 = vpack.c.b16 %v934, %v934
      %vm938 = vcmask 162816
      %v940 = vsel %vm938, %v918, 0
      %v943 = vsel %vm418, %v936, 0
      %945 = vmatprep.subr.bf16.mxu0 0
      %946 = vmatpush1.bf16.msra.mxu0 %v935
      %947 = vmatprep.subr.bf16.mxu0 0
      %948 = vmatpush1.bf16.msra.mxu0 %v943
      %949 = vmatprep.subr.bf16.mxu0 0
      %950 = vmatpush1.bf16.msra.mxu0 0
      %951 = vmatprep.subr.bf16.mxu0 0
      %952 = vmatpush1.bf16.msra.mxu0 0
      %953 = vmatprep.subr.bf16.mxu0 0
      %954 = vmatpush1.bf16.msra.mxu0 0
      %955 = vmatprep.subr.bf16.mxu0 0
      %956 = vmatpush1.bf16.msra.mxu0 0
      %957 = vmatprep.subr.bf16.mxu0 0
      %958 = vmatpush1.bf16.msra.mxu0 0
      %959 = vmatprep.subr.bf16.mxu0 0
      %960 = vmatpush1.bf16.msra.mxu0 0
      %961 = vmatprep.subr.bf16.mxu0 0
      %962 = vmatpush1.bf16.msra.mxu0 0
      %963 = vmatprep.subr.bf16.mxu0 0
      %964 = vmatpush1.bf16.msra.mxu0 0
      %965 = vmatprep.subr.bf16.mxu0 0
      %966 = vmatpush1.bf16.msra.mxu0 0
      %967 = vmatprep.subr.bf16.mxu0 0
      %968 = vmatpush1.bf16.msra.mxu0 0
      %969 = vmatprep.subr.bf16.mxu0 0
      %970 = vmatpush1.bf16.msra.mxu0 0
      %971 = vmatprep.subr.bf16.mxu0 0
      %972 = vmatpush1.bf16.msra.mxu0 0
      %973 = vmatprep.subr.bf16.mxu0 0
      %974 = vmatpush1.bf16.msra.mxu0 0
      %975 = vmatprep.subr.bf16.mxu0 0
      %976 = vmatpush1.bf16.msra.mxu0 0
      %977 = vmatprep.mubr.bf16.mxu0 0
      %978 = vmatmul.mubr.bf16.gmra.mrb[0].mxu0 %v940
      %v979 = vpop.f32.mrb[0].mxu0
      %v980 = vadd.f32 %v927, %v979
      %v981 = vpop.f32.mrb[0].mxu0
      %v982 = vpop.f32.mrb[0].mxu0
      %v983 = vpop.f32.mrb[0].mxu0
      %984 = vdwg.mxu0
      %v985 = vmax.f32 %v980, 0.0
      %v986 = vld [vmem:[%s8] sm:$0x1]
      %v988 = vlaneseq
      %v989 = vshrl.u32 %v988, 7
      %v990 = vsub.s32 0, %v989
      %v991 = vrot.slane %v986, %v990
      %v993 = vmul.f32 %v985, %v991
      %vm994 = vcmask 130048
      %v995 = vsel %vm994, %v993, 0.0
      %996 = vadd.xlane.f32.xlu0 %v995
      %v997 = vpop.xlane.xlu0 %996
      %v998 = vld [vmem:[#allocation2] sm:$0x1]
      %v1000 = vlaneseq
      %v1001 = vshrl.u32 %v1000, 7
      %v1002 = vsub.s32 0, %v1001
      %v1003 = vrot.slane %v998, %v1002
      %v1005 = vadd.f32 %v997, %v1003
      %v1006 = vsub.f32 0.0, %v1005
      %v1007 = vmul.f32 %v1006, 1.442695
      %v1008 = vpow.pop %v1007
      %v1009 = vadd.f32 %v1008, 1.0
      %v1010 = vrcp.pop %v1009
      %v1011 = vmul.f32 1.0, %v1010
      %vm1012 = vcmask 7168
      %1013 = vst.msk [vmem:[%s376] sm:$0xff] %vm1012, %v1011
      %p1014 = scmp.lt.s32.totalorder %s23, 1
      %s1015 = scalar_select %p1014, %s23, 1
      %s1016 = smul.addr %s1015, 8
      %s1017 = scalar_lea.vmem %s10, %s1016
      // Predicated region
      $region61: #{classifier_mlp_forward.1} parent=59 // pred_check
        %p1018 = pneg %p261
      $region62: #{classifier_mlp_forward.1} parent=59 // pred_check_branch
        %1020 = sbr.rel (%p1018) target = $region64
      $region63: #{classifier_mlp_forward.1} parent=59 // pred_region
        _
      $region64: #{classifier_mlp_forward.1} parent=59 // pred_fallthru
        _
    $region60: #{classifier_mlp_forward.1} parent=5 // pred_fallthru
      _
    %p1021 = scmp.le.s32.totalorder 2, %s18
    // Predicated region
    $region65: #{classifier_mlp_forward.1} parent=5 // pred_check
      %p1022 = pneg %p1021
    $region66: #{classifier_mlp_forward.1} parent=5 // pred_check_branch
      %1024 = sbr.rel (%p1022) target = $region68
    $region67: #{classifier_mlp_forward.1} parent=5 // pred_region
      %s1025 = ssub.s32 %s18, 2
      // Predicated region
      $region69: #{classifier_mlp_forward.1} parent=67 // pred_check
        %p1026 = pneg %p267
      $region70: #{classifier_mlp_forward.1} parent=67 // pred_check_branch
        %1028 = sbr.rel (%p1026) target = $region72
      $region71: #{classifier_mlp_forward.1} parent=67 // pred_region
        %p1029 = scmp.lt.s32.totalorder %s24, 1
        %s1030 = scalar_select %p1029, %s24, 1
        %s1031 = smul.addr %s1030, 8
        %s1032 = scalar_lea.vmem %s10, %s1031
      $region72: #{classifier_mlp_forward.1} parent=67 // pred_fallthru
        _
    $region68: #{classifier_mlp_forward.1} parent=5 // pred_fallthru
      _
  $region6: #{classifier_mlp_forward.1} parent=0 // loop_footer
    %s22 = sadd.s32 1, %s18
  $region7: #{classifier_mlp_forward.1} parent=0 // loop_footer_branch
    %17 = sbr.rel target = $region3
  $region8: #{classifier_mlp_forward.1} parent=0 // loop_exit
    _

</llo_original>
